<compile_context>
chip_gen: v6e
topology: v6e:2x2x1
jax: 0.10.0
libtpu: 0.0.40
codegen_flags: <defaults>
</compile_context>

<pallas_src>
import math

import jax
import jax.numpy as jnp
from jax import lax
from jax.experimental import pallas as pl
from jax.experimental.pallas import tpu as pltpu


# ----------------------------------------------------------------------------
# Nearest-neighbour mask downsampling (glue, matches F.interpolate 'nearest')
# ----------------------------------------------------------------------------
def downsample_mask_nearest(mask, out_h, out_w):
    B, H, W = mask.shape
    idx_h = (jnp.arange(out_h) * H) // out_h
    idx_w = (jnp.arange(out_w) * W) // out_w
    return mask[:, idx_h][:, :, idx_w]


# ----------------------------------------------------------------------------
# DabDetrConvModel.forward — fused conv stage + sine position embedding
# ----------------------------------------------------------------------------
def dab_detr_conv_model(pixel_values, pixel_mask, conv_w, conv_b, *, d_model,
                        stride=2, padding=1, temperature_h=20.0,
                        temperature_w=20.0, scale=2.0 * math.pi):
    # TODO(synk): the real DabDetrConvEncoder wraps a pretrained multi-stage
    # ResNet; here it is a single synthetic Conv2d(Cin->Cout, 3x3, stride 2).
    B, Cin, H, W = pixel_values.shape
    Cout, _, kh, kw = conv_w.shape
    Ho = (H + 2 * padding - kh) // stride + 1
    Wo = (W + 2 * padding - kw) // stride + 1
    HW = Ho * Wo
    E = d_model // 2                               # embedding_dim = d_model / 2
    K = kh * kw * Cin                              # im2col contraction depth

    LANE = 128
    HW_pad = ((HW + LANE - 1) // LANE) * LANE      # lane-dense spatial axis
    hw_tile = LANE
    for cand in (512, 384, 256, 128):              # largest tile dividing HW_pad
        if HW_pad % cand == 0:
            hw_tile = cand
            break
    T = HW_pad // hw_tile

    # ---- wrapper-side im2col, channel-major (spatial on lanes) -------------
    # (With Cin=4 the extra HBM read is small vs. the output traffic; this
    #  removes all in-kernel tap slicing and keeps the kernel MXU-bound.)
    xp = jnp.pad(pixel_values,
                 ((0, 0), (0, 0), (padding, padding), (padding, padding)))
    taps = []
    for dh in range(kh):
        for dw in range(kw):
            taps.append(xp[:, :, dh::stride, dw::stride][:, :, :Ho, :Wo])
    patches = jnp.stack(taps, axis=1).reshape(B, K, HW)   # k = (dh*kw+dw)*Cin + c
    patches = jnp.pad(patches, ((0, 0), (0, 0), (0, HW_pad - HW)))
    patches = patches.astype(jnp.bfloat16)

    # weights: (Cout, Cin, kh, kw) -> (Cout, K) bf16 matching the patch order
    w_cm = (jnp.transpose(conv_w, (2, 3, 1, 0))    # (kh, kw, Cin, Cout)
            .reshape(K, Cout).T                    # (Cout, K)
            .astype(jnp.bfloat16))
    b_col = conv_b.reshape(Cout, 1).astype(jnp.float32)

    # ---- downsampled mask + normalized coords (tiny, needs full mask) ------
    mask_ds = downsample_mask_nearest(pixel_mask, Ho, Wo)
    m = mask_ds.astype(jnp.float32)
    eps = 1e-6
    y_emb = jnp.cumsum(m, axis=1)
    x_emb = jnp.cumsum(m, axis=2)
    y_norm = y_emb / (y_emb[:, -1:, :] + eps) * scale
    x_norm = x_emb / (x_emb[:, :, -1:] + eps) * scale
    base = jnp.stack([y_norm.reshape(B, HW), x_norm.reshape(B, HW)], axis=1)
    base = jnp.pad(base, ((0, 0), (0, 0), (0, HW_pad - HW))).astype(jnp.float32)

    # per-channel constants, hoisted: 1/dim_t and the cos->sin(+pi/2) phase
    i = jnp.arange(E, dtype=jnp.float32)
    expo = 2.0 * jnp.floor(i / 2.0) / float(E)
    inv_t = jnp.concatenate([1.0 / (temperature_h ** expo),
                             1.0 / (temperature_w ** expo)])
    inv_t = inv_t.reshape(2 * E, 1).astype(jnp.float32)
    phase = jnp.tile((math.pi / 2.0) * (jnp.arange(E) % 2).astype(jnp.float32), 2)
    phase = phase.reshape(2 * E, 1)

    def fused_kernel(patch_ref, w_ref, b_ref, base_ref, invt_ref, phase_ref,
                     feat_ref, pos_ref):
        # ---- conv: single channel-major MXU matmul -------------------------
        # (Cout, K) x (K, hw_tile) -> (Cout, hw_tile), bf16 inputs, f32 acc.
        acc = jnp.dot(w_ref[...], patch_ref[...],
                      preferred_element_type=jnp.float32)
        feat_ref[...] = (acc + b_ref[...]).astype(feat_ref.dtype)

        # ---- DAB-DETR sine position embedding, channel-major ---------------
        # channel layout [pos_y (E) | pos_x (E)]; cos(a) == sin(a + pi/2),
        # so a single sin pass over (2E, hw_tile) on the EUP.
        y_row = base_ref[0:1, :]                        # (1, hw_tile)
        x_row = base_ref[1:2, :]                        # (1, hw_tile)
        chan = lax.broadcasted_iota(jnp.int32, (2 * E, 1), 0)
        coord = jnp.where(chan < E, y_row, x_row)       # (2E, hw_tile)
        angles = coord * invt_ref[...] + phase_ref[...]
        pos_ref[...] = jnp.sin(angles).astype(pos_ref.dtype)

    feat_cm, pos_cm = pl.pallas_call(
        fused_kernel,
        out_shape=(jax.ShapeDtypeStruct((B, Cout, HW_pad), jnp.float32),
                   jax.ShapeDtypeStruct((B, 2 * E, HW_pad), jnp.float32)),
        grid=(B, T),
        in_specs=[
            pl.BlockSpec((None, K, hw_tile), lambda b, t: (b, 0, t)),
            pl.BlockSpec((Cout, K), lambda b, t: (0, 0)),
            pl.BlockSpec((Cout, 1), lambda b, t: (0, 0)),
            pl.BlockSpec((None, 2, hw_tile), lambda b, t: (b, 0, t)),
            pl.BlockSpec((2 * E, 1), lambda b, t: (0, 0)),
            pl.BlockSpec((2 * E, 1), lambda b, t: (0, 0)),
        ],
        out_specs=(
            pl.BlockSpec((None, Cout, hw_tile), lambda b, t: (b, 0, t)),
            pl.BlockSpec((None, 2 * E, hw_tile), lambda b, t: (b, 0, t)),
        ),
        compiler_params=pltpu.CompilerParams(
            # batch and spatial tiles are fully independent; on v7x this shards
            # across the 2 TCs even at B=1, on v5e/v6e it is just a clean loop.
            dimension_semantics=("parallel", "parallel"),
            vmem_limit_bytes=48 * 1024 * 1024,   # headroom under v7x 64 MiB
        ),
    )(patches, w_cm, b_col, base, inv_t, phase)

    # ---- back to PyTorch NCHW: channel-major kernel output => reshape only --
    feature_map = (feat_cm[:, :, :HW]
                   .reshape(B, Cout, Ho, Wo)
                   .astype(pixel_values.dtype))
    pos = (pos_cm[:, :, :HW]
           .reshape(B, 2 * E, Ho, Wo)
           .astype(feature_map.dtype))

    out = [(feature_map, mask_ds)]
    return out, [pos]


if __name__ == "__main__":
    key = jax.random.PRNGKey(0)
    B, Cin, H, W = 2, 4, 16, 16
    Cout, kh, kw, stride, pad = 64, 3, 3, 2, 1
    d_model = 32

    k1, k2, k3 = jax.random.split(key, 3)
    pixel_values = jax.random.normal(k1, (B, Cin, H, W), dtype=jnp.float32)

    # pixel_mask: 1 = valid pixel, 0 = padding (second image padded right/bottom)
    pixel_mask = jnp.ones((B, H, W), dtype=jnp.int32)
    pixel_mask = pixel_mask.at[1, 12:, :].set(0)
    pixel_mask = pixel_mask.at[1, :, 10:].set(0)
    pixel_mask = pixel_mask.astype(bool)

    fan_in = Cin * kh * kw
    conv_w = jax.random.normal(k2, (Cout, Cin, kh, kw),
                               dtype=jnp.float32) / math.sqrt(fan_in)
    conv_b = 0.01 * jax.random.normal(k3, (Cout,), dtype=jnp.float32)

    out, pos = dab_detr_conv_model(pixel_values, pixel_mask, conv_w, conv_b,
                                   d_model=d_model, stride=stride, padding=pad)

    feat, msk = out[0]
    jax.block_until_ready(feat)
    jax.block_until_ready(msk)
    jax.block_until_ready(pos[0])

    Ho, Wo = H // stride, W // stride
    assert feat.shape == (B, Cout, Ho, Wo)
    assert msk.shape == (B, Ho, Wo)
    assert pos[0].shape == (B, d_model, Ho, Wo)

    # ---- correctness checks vs. pure-JAX references --------------------------
    # Conv is intentionally computed with bf16 inputs/weights (f32 accumulate);
    # the reference mirrors the bf16 rounding of the operands.
    x_b = pixel_values.astype(jnp.bfloat16).astype(jnp.float32)
    w_b = conv_w.astype(jnp.bfloat16).astype(jnp.float32)
    ref_feat = lax.conv_general_dilated(
        x_b, w_b, window_strides=(stride, stride),
        padding=[(pad, pad), (pad, pad)],
        dimension_numbers=("NCHW", "OIHW", "NCHW"),
    ) + conv_b.reshape(1, Cout, 1, 1)
    err_feat = float(jnp.max(jnp.abs(feat - ref_feat)))

    def pos_ref_fn(mask_bool):
        m = mask_bool.astype(jnp.float32)
        y = jnp.cumsum(m, axis=1)
        x = jnp.cumsum(m, axis=2)
        sc = 2.0 * math.pi
        y = y / (y[:, -1:, :] + 1e-6) * sc
        x = x / (x[:, :, -1:] + 1e-6) * sc
        e = d_model // 2
        idx = jnp.arange(e, dtype=jnp.float32)
        dim_t = 20.0 ** (2.0 * jnp.floor(idx / 2.0) / float(e))
        py = y[:, :, :, None] / dim_t
        px = x[:, :, :, None] / dim_t
        even = (jnp.arange(e) % 2) == 0
        py = jnp.where(even, jnp.sin(py), jnp.cos(py))
        px = jnp.where(even, jnp.sin(px), jnp.cos(px))
        return jnp.concatenate([py, px], axis=-1).transpose(0, 3, 1, 2)

    ref_pos = pos_ref_fn(msk)
    err_pos = float(jnp.max(jnp.abs(pos[0] - ref_pos)))

    assert err_feat < 1e-2, f"conv mismatch: {err_feat}"
    assert err_pos < 2e-2, f"pos-embedding mismatch: {err_pos}"
    print("KERNEL_OK")
</pallas_src>

<mosaic_0001>
module attributes {stable_mosaic.version = 11 : i64} {
  func.func @fused_kernel(%arg0: i32, %arg1: i32, %arg2: memref<1x36x128xbf16, #tpu.memory_space<vmem>>, %arg3: memref<64x36xbf16, #tpu.memory_space<vmem>>, %arg4: memref<64x1xf32, #tpu.memory_space<vmem>>, %arg5: memref<1x2x128xf32, #tpu.memory_space<vmem>>, %arg6: memref<32x1xf32, #tpu.memory_space<vmem>>, %arg7: memref<32x1xf32, #tpu.memory_space<vmem>>, %arg8: memref<1x64x128xf32, #tpu.memory_space<vmem>>, %arg9: memref<1x32x128xf32, #tpu.memory_space<vmem>>) attributes {dimension_semantics = [#tpu.dimension_semantics<parallel>, #tpu.dimension_semantics<parallel>], iteration_bounds = array<i64: 2, 1>, scalar_prefetch = 0 : i64, scratch_operands = 0 : i64, tpu.core_type = #tpu.core_type<tc>, window_params = [{transform_indices = @transform_0, window_bounds = array<i64: 1, 36, 128>}, {pipeline_mode = #tpu.pipeline_mode<synchronous>, transform_indices = @transform_1, window_bounds = array<i64: 64, 36>}, {pipeline_mode = #tpu.pipeline_mode<synchronous>, transform_indices = @transform_2, window_bounds = array<i64: 64, 1>}, {transform_indices = @transform_3, window_bounds = array<i64: 1, 2, 128>}, {pipeline_mode = #tpu.pipeline_mode<synchronous>, transform_indices = @transform_4, window_bounds = array<i64: 32, 1>}, {pipeline_mode = #tpu.pipeline_mode<synchronous>, transform_indices = @transform_5, window_bounds = array<i64: 32, 1>}, {transform_indices = @transform_6, window_bounds = array<i64: 1, 64, 128>}, {transform_indices = @transform_7, window_bounds = array<i64: 1, 32, 128>}]} {
    %c0 = arith.constant 0 : index
    %c0_0 = arith.constant 0 : index
    %0 = vector.load %arg3[%c0, %c0_0] : memref<64x36xbf16, #tpu.memory_space<vmem>>, vector<64x36xbf16>
    %c0_1 = arith.constant 0 : index
    %c0_2 = arith.constant 0 : index
    %c0_3 = arith.constant 0 : index
    %1 = vector.load %arg2[%c0_1, %c0_2, %c0_3] : memref<1x36x128xbf16, #tpu.memory_space<vmem>>, vector<1x36x128xbf16>
    %2 = vector.shape_cast %1 : vector<1x36x128xbf16> to vector<36x128xbf16>
    %cst = arith.constant dense<0.000000e+00> : vector<64x128xf32>
    %3 = tpu.matmul %0, %2, %cst {dimension_numbers = #tpu.dot_dimension_numbers<[1], [0], [0], [1], [0, 0, 1, 1], [], []>} : vector<64x36xbf16>, vector<36x128xbf16>, vector<64x128xf32> -> vector<64x128xf32>
    %c0_4 = arith.constant 0 : index
    %c0_5 = arith.constant 0 : index
    %4 = vector.load %arg4[%c0_4, %c0_5] : memref<64x1xf32, #tpu.memory_space<vmem>>, vector<64x1xf32>
    %5 = vector.broadcast %4 : vector<64x1xf32> to vector<64x128xf32>
    %6 = arith.addf %3, %5 : vector<64x128xf32>
    %c0_6 = arith.constant 0 : index
    %c0_7 = arith.constant 0 : index
    %c0_8 = arith.constant 0 : index
    %7 = vector.load %arg8[%c0_6, %c0_7, %c0_8] : memref<1x64x128xf32, #tpu.memory_space<vmem>>, vector<1x64x128xf32>
    %8 = vector.shape_cast %7 : vector<1x64x128xf32> to vector<64x128xf32>
    %9 = vector.shape_cast %6 : vector<64x128xf32> to vector<1x64x128xf32>
    tpu.vector_store %arg8[%c0_6, %c0_7, %c0_8], %9 {strides = array<i32>} : memref<1x64x128xf32, #tpu.memory_space<vmem>>, vector<1x64x128xf32>,
    %c0_9 = arith.constant 0 : index
    %c0_10 = arith.constant 0 : index
    %c0_11 = arith.constant 0 : index
    %10 = vector.load %arg5[%c0_9, %c0_10, %c0_11] : memref<1x2x128xf32, #tpu.memory_space<vmem>>, vector<1x1x128xf32>
    %11 = vector.shape_cast %10 : vector<1x1x128xf32> to vector<1x128xf32>
    %c0_12 = arith.constant 0 : index
    %c1 = arith.constant 1 : index
    %c0_13 = arith.constant 0 : index
    %12 = vector.load %arg5[%c0_12, %c1, %c0_13] : memref<1x2x128xf32, #tpu.memory_space<vmem>>, vector<1x1x128xf32>
    %13 = vector.shape_cast %12 : vector<1x1x128xf32> to vector<1x128xf32>
    %14 = tpu.iota {dimensions = array<i32: 0>} : vector<32x1xi32>
    %c16_i32 = arith.constant 16 : i32
    %15 = vector.broadcast %c16_i32 : i32 to vector<32x1xi32>
    %16 = arith.cmpi slt, %14, %15 : vector<32x1xi32>
    %17 = vector.shape_cast %16 : vector<32x1xi1> to vector<32x1xi1>
    %18 = vector.broadcast %17 : vector<32x1xi1> to vector<32x128xi1>
    %19 = vector.shape_cast %11 : vector<1x128xf32> to vector<1x128xf32>
    %20 = vector.broadcast %19 : vector<1x128xf32> to vector<32x128xf32>
    %21 = vector.shape_cast %13 : vector<1x128xf32> to vector<1x128xf32>
    %22 = vector.broadcast %21 : vector<1x128xf32> to vector<32x128xf32>
    %23 = arith.select %18, %20, %22 : vector<32x128xi1>, vector<32x128xf32>
    %c0_14 = arith.constant 0 : index
    %c0_15 = arith.constant 0 : index
    %24 = vector.load %arg6[%c0_14, %c0_15] : memref<32x1xf32, #tpu.memory_space<vmem>>, vector<32x1xf32>
    %25 = vector.broadcast %24 : vector<32x1xf32> to vector<32x128xf32>
    %26 = arith.mulf %23, %25 : vector<32x128xf32>
    %c0_16 = arith.constant 0 : index
    %c0_17 = arith.constant 0 : index
    %27 = vector.load %arg7[%c0_16, %c0_17] : memref<32x1xf32, #tpu.memory_space<vmem>>, vector<32x1xf32>
    %28 = vector.broadcast %27 : vector<32x1xf32> to vector<32x128xf32>
    %29 = arith.addf %26, %28 : vector<32x128xf32>
    %30 = math.sin %29 : vector<32x128xf32>
    %c0_18 = arith.constant 0 : index
    %c0_19 = arith.constant 0 : index
    %c0_20 = arith.constant 0 : index
    %31 = vector.load %arg9[%c0_18, %c0_19, %c0_20] : memref<1x32x128xf32, #tpu.memory_space<vmem>>, vector<1x32x128xf32>
    %32 = vector.shape_cast %31 : vector<1x32x128xf32> to vector<32x128xf32>
    %33 = vector.shape_cast %30 : vector<32x128xf32> to vector<1x32x128xf32>
    tpu.vector_store %arg9[%c0_18, %c0_19, %c0_20], %33 {strides = array<i32>} : memref<1x32x128xf32, #tpu.memory_space<vmem>>, vector<1x32x128xf32>,
    return
  }
  func.func @transform_0(%arg0: i32, %arg1: i32) -> (i32, i32, i32) {
    %c0_i32 = arith.constant 0 : i32
    %c0_i32_0 = arith.constant 0 : i32
    return %arg0, %c0_i32, %arg1 : i32, i32, i32
  }
  func.func @transform_1(%arg0: i32, %arg1: i32) -> (i32, i32) {
    %c0_i32 = arith.constant 0 : i32
    %c0_i32_0 = arith.constant 0 : i32
    %c0_i32_1 = arith.constant 0 : i32
    return %c0_i32, %c0_i32_0 : i32, i32
  }
  func.func @transform_2(%arg0: i32, %arg1: i32) -> (i32, i32) {
    %c0_i32 = arith.constant 0 : i32
    %c0_i32_0 = arith.constant 0 : i32
    %c0_i32_1 = arith.constant 0 : i32
    return %c0_i32, %c0_i32_0 : i32, i32
  }
  func.func @transform_3(%arg0: i32, %arg1: i32) -> (i32, i32, i32) {
    %c0_i32 = arith.constant 0 : i32
    %c0_i32_0 = arith.constant 0 : i32
    return %arg0, %c0_i32, %arg1 : i32, i32, i32
  }
  func.func @transform_4(%arg0: i32, %arg1: i32) -> (i32, i32) {
    %c0_i32 = arith.constant 0 : i32
    %c0_i32_0 = arith.constant 0 : i32
    %c0_i32_1 = arith.constant 0 : i32
    return %c0_i32, %c0_i32_0 : i32, i32
  }
  func.func @transform_5(%arg0: i32, %arg1: i32) -> (i32, i32) {
    %c0_i32 = arith.constant 0 : i32
    %c0_i32_0 = arith.constant 0 : i32
    %c0_i32_1 = arith.constant 0 : i32
    return %c0_i32, %c0_i32_0 : i32, i32
  }
  func.func @transform_6(%arg0: i32, %arg1: i32) -> (i32, i32, i32) {
    %c0_i32 = arith.constant 0 : i32
    %c0_i32_0 = arith.constant 0 : i32
    return %arg0, %c0_i32, %arg1 : i32, i32, i32
  }
  func.func @transform_7(%arg0: i32, %arg1: i32) -> (i32, i32, i32) {
    %c0_i32 = arith.constant 0 : i32
    %c0_i32_0 = arith.constant 0 : i32
    return %arg0, %c0_i32, %arg1 : i32, i32, i32
  }
}

</mosaic_0001>

<llo_original>
// kernel: tpu_custom_call.1
$region0: #{tpu_custom_call.1}
  #allocation0 [shape = 'u32[]', space=smem, size = 0x4, offset = 0x4, fixed_abs, tag = 'smem constant byte address 0x4 - core index']
  #allocation1 [shape = 'u32[144,128]{1,0:T(1,128)}', space=vmem, size = 0x12000, scoped, tag = 'internal scratch']
  %s0 = inlined_call_operand.vmem [shape: bf16[2,36,128], index: 0, kind: input, shape index: {}]
  %s1 = inlined_call_operand.vmem [shape: bf16[64,36], index: 1, kind: input, shape index: {}]
  %s2 = inlined_call_operand.vmem [shape: f32[64,1], index: 2, kind: input, shape index: {}]
  %s3 = inlined_call_operand.vmem [shape: f32[2,2,128], index: 3, kind: input, shape index: {}]
  %s4 = inlined_call_operand.vmem [shape: f32[32,1], index: 4, kind: input, shape index: {}]
  %s5 = inlined_call_operand.vmem [shape: f32[32,1], index: 5, kind: input, shape index: {}]
  %s6 = inlined_call_operand.hbm [shape: f32[2,64,128], index: 6, kind: output, shape index: {0}]
  %s7 = inlined_call_operand.hbm [shape: f32[2,32,128], index: 7, kind: output, shape index: {1}]
  %8 = xla_tuple %s6, %s7
  %s9 = sld [smem:[#allocation0]]
  $region65: #{tpu_custom_call.1} parent=0
    _
  %s11 = ssub.s32 1, %s9
  %s12 = scalar_select 0, %s11, %s9
  $region1: #{tpu_custom_call.1} parent=0
    #allocation2 [shape = 'u8[65536]{0}', space=vmem, size = 0x10000, scoped, tag = 'output window, operand 0']
    #allocation3 [shape = 's32[2]{0}', space=sflag, size = 0x8, scoped, tag = 'scoped memory for tpu_custom_call.1']
    #allocation4 [shape = 'u8[32768]{0}', space=vmem, size = 0x8000, scoped, tag = 'output window, operand 1']
    #allocation5 [shape = 's32[2]{0}', space=sflag, size = 0x8, scoped, tag = 'scoped memory for tpu_custom_call.1']
    %13 = vsyncpa [#allocation3], 0
    %s14 = scalar_lea.sflag [#allocation3], 1
    %15 = vsyncpa %s14, 0
    %16 = vsyncpa [#allocation5], 0
    %s17 = scalar_lea.sflag [#allocation5], 1
    %18 = vsyncpa %s17, 0
    loop: start=0, step=1, limit=4
    $region2: #{tpu_custom_call.1} parent=1 // loop_pre_header
      _
    $region3: #{tpu_custom_call.1} parent=1 // loop_header
      %s20 = sphi 0, %s24
      %p21 = scmp.ge.s32.totalorder %s20, 4
      %s27 = sphi 0, %s39
      %s28 = sphi 0, %s35
      %s29 = sphi 0, %s27
      %s30 = sphi 0, %s28
      %s31 = sphi 0, %s29
      %s32 = sphi 0, %s30
      %s44 = sphi 0, %s46
      %s47 = sphi 0, %s44
      %s48 = sphi 0, %s47
      %s64 = sphi 0, %s48
      %s68 = sphi 0, %s68
      %s70 = sphi 0, %s68
      %s71 = sphi 0, %s70
      %s85 = sphi 0, %s71
      %s89 = sphi 0, %s89
      %s91 = sphi 0, %s89
      %s92 = sphi 0, %s91
      %s106 = sphi 0, %s92
      %s114 = sphi 0, %s116
      %s117 = sphi 0, %s114
      %s118 = sphi 0, %s117
      %s134 = sphi 0, %s118
      %s138 = sphi 0, %s138
      %s140 = sphi 0, %s138
      %s141 = sphi 0, %s140
      %s155 = sphi 0, %s141
      %s159 = sphi 0, %s159
      %s161 = sphi 0, %s159
      %s162 = sphi 0, %s161
      %s176 = sphi 0, %s162
      %s184 = sphi 0, %s186
      %s187 = sphi 0, %s184
      %s188 = sphi 0, %s187
      %s204 = sphi 0, %s188
      %s212 = sphi 0, %s214
      %s215 = sphi 0, %s212
      %s216 = sphi 0, %s215
      %s232 = sphi 0, %s216
    $region4: #{tpu_custom_call.1} parent=1 // loop_header_branch
      %23 = sbr.rel (%p21) target = $region8
    $region5: #{tpu_custom_call.1} parent=1 // loop_body
      %s25 = ssub.s32 %s20, 1
      %s26 = ssub.s32 %s20, 2
      %s33 = sadd.s32 1, %s28
      %p34 = scmp.ge.s32.totalorder %s33, 1
      %s35 = scalar_select %p34, 0, %s33
      %s36 = sadd.s32 1, %s27
      %s37 = scalar_select %p34, %s36, %s27
      %p38 = scmp.ge.s32.totalorder %s37, 2
      %s39 = scalar_select %p38, 0, %s37
      %s40 = ssub.s32 %s27, %s39
      %s41 = ssub.s32 %s28, %s35
      %s42 = sor.u32 %s40, %s41
      %p43 = scmp.eq.s32.totalorder %s42, 0
      %s45 = sadd.s32 %s44, 1
      %s46 = scalar_select %p43, %s44, %s45
      %p49 = pneg %p43
      %p50 = scmp.eq.s32.totalorder %s20, 1
      %p51 = por %p49, %p50
      %p52 = scmp.ne.s32.totalorder %s44, %s47
      %p53 = scmp.eq.s32.totalorder %s20, 0
      %p54 = por %p52, %p53
      %p55 = scmp.ne.s32.totalorder %s44, %s47
      %p56 = scmp.eq.s32.totalorder %s25, 1
      %p57 = por %p55, %p56
      %p58 = scmp.ne.s32.totalorder %s47, %s48
      %p59 = scmp.eq.s32.totalorder %s25, 0
      %p60 = por %p58, %p59
      %p61 = scmp.ne.s32.totalorder %s47, %s48
      %p62 = scmp.eq.s32.totalorder %s26, 1
      %p63 = por %p61, %p62
      %p65 = scmp.ne.s32.totalorder %s48, %s64
      %p66 = scmp.eq.s32.totalorder %s26, 0
      %p67 = por %p65, %p66
      %s69 = sadd.s32 %s68, 1
      %p72 = scmp.eq.s32.totalorder %s20, 1
      %p73 = scmp.ne.s32.totalorder %s68, %s70
      %p74 = scmp.eq.s32.totalorder %s20, 0
      %p75 = por %p73, %p74
      %p76 = scmp.ne.s32.totalorder %s68, %s70
      %p77 = scmp.eq.s32.totalorder %s25, 1
      %p78 = por %p76, %p77
      %p79 = scmp.ne.s32.totalorder %s70, %s71
      %p80 = scmp.eq.s32.totalorder %s25, 0
      %p81 = por %p79, %p80
      %p82 = scmp.ne.s32.totalorder %s70, %s71
      %p83 = scmp.eq.s32.totalorder %s26, 1
      %p84 = por %p82, %p83
      %p86 = scmp.ne.s32.totalorder %s71, %s85
      %p87 = scmp.eq.s32.totalorder %s26, 0
      %p88 = por %p86, %p87
      %s90 = sadd.s32 %s89, 1
      %p93 = scmp.eq.s32.totalorder %s20, 1
      %p94 = scmp.ne.s32.totalorder %s89, %s91
      %p95 = scmp.eq.s32.totalorder %s20, 0
      %p96 = por %p94, %p95
      %p97 = scmp.ne.s32.totalorder %s89, %s91
      %p98 = scmp.eq.s32.totalorder %s25, 1
      %p99 = por %p97, %p98
      %p100 = scmp.ne.s32.totalorder %s91, %s92
      %p101 = scmp.eq.s32.totalorder %s25, 0
      %p102 = por %p100, %p101
      %p103 = scmp.ne.s32.totalorder %s91, %s92
      %p104 = scmp.eq.s32.totalorder %s26, 1
      %p105 = por %p103, %p104
      %p107 = scmp.ne.s32.totalorder %s92, %s106
      %p108 = scmp.eq.s32.totalorder %s26, 0
      %p109 = por %p107, %p108
      %s110 = ssub.s32 %s27, %s39
      %s111 = ssub.s32 %s28, %s35
      %s112 = sor.u32 %s110, %s111
      %p113 = scmp.eq.s32.totalorder %s112, 0
      %s115 = sadd.s32 %s114, 1
      %s116 = scalar_select %p113, %s114, %s115
      %p119 = pneg %p113
      %p120 = scmp.eq.s32.totalorder %s20, 1
      %p121 = por %p119, %p120
      %p122 = scmp.ne.s32.totalorder %s114, %s117
      %p123 = scmp.eq.s32.totalorder %s20, 0
      %p124 = por %p122, %p123
      %p125 = scmp.ne.s32.totalorder %s114, %s117
      %p126 = scmp.eq.s32.totalorder %s25, 1
      %p127 = por %p125, %p126
      %p128 = scmp.ne.s32.totalorder %s117, %s118
      %p129 = scmp.eq.s32.totalorder %s25, 0
      %p130 = por %p128, %p129
      %p131 = scmp.ne.s32.totalorder %s117, %s118
      %p132 = scmp.eq.s32.totalorder %s26, 1
      %p133 = por %p131, %p132
      %p135 = scmp.ne.s32.totalorder %s118, %s134
      %p136 = scmp.eq.s32.totalorder %s26, 0
      %p137 = por %p135, %p136
      %s139 = sadd.s32 %s138, 1
      %p142 = scmp.eq.s32.totalorder %s20, 1
      %p143 = scmp.ne.s32.totalorder %s138, %s140
      %p144 = scmp.eq.s32.totalorder %s20, 0
      %p145 = por %p143, %p144
      %p146 = scmp.ne.s32.totalorder %s138, %s140
      %p147 = scmp.eq.s32.totalorder %s25, 1
      %p148 = por %p146, %p147
      %p149 = scmp.ne.s32.totalorder %s140, %s141
      %p150 = scmp.eq.s32.totalorder %s25, 0
      %p151 = por %p149, %p150
      %p152 = scmp.ne.s32.totalorder %s140, %s141
      %p153 = scmp.eq.s32.totalorder %s26, 1
      %p154 = por %p152, %p153
      %p156 = scmp.ne.s32.totalorder %s141, %s155
      %p157 = scmp.eq.s32.totalorder %s26, 0
      %p158 = por %p156, %p157
      %s160 = sadd.s32 %s159, 1
      %p163 = scmp.eq.s32.totalorder %s20, 1
      %p164 = scmp.ne.s32.totalorder %s159, %s161
      %p165 = scmp.eq.s32.totalorder %s20, 0
      %p166 = por %p164, %p165
      %p167 = scmp.ne.s32.totalorder %s159, %s161
      %p168 = scmp.eq.s32.totalorder %s25, 1
      %p169 = por %p167, %p168
      %p170 = scmp.ne.s32.totalorder %s161, %s162
      %p171 = scmp.eq.s32.totalorder %s25, 0
      %p172 = por %p170, %p171
      %p173 = scmp.ne.s32.totalorder %s161, %s162
      %p174 = scmp.eq.s32.totalorder %s26, 1
      %p175 = por %p173, %p174
      %p177 = scmp.ne.s32.totalorder %s162, %s176
      %p178 = scmp.eq.s32.totalorder %s26, 0
      %p179 = por %p177, %p178
      %s180 = ssub.s32 %s27, %s39
      %s181 = ssub.s32 %s28, %s35
      %s182 = sor.u32 %s180, %s181
      %p183 = scmp.eq.s32.totalorder %s182, 0
      %s185 = sadd.s32 %s184, 1
      %s186 = scalar_select %p183, %s184, %s185
      %p189 = pneg %p183
      %p190 = scmp.eq.s32.totalorder %s20, 1
      %p191 = por %p189, %p190
      %p192 = scmp.ne.s32.totalorder %s184, %s187
      %p193 = scmp.eq.s32.totalorder %s20, 0
      %p194 = por %p192, %p193
      %p195 = scmp.ne.s32.totalorder %s184, %s187
      %p196 = scmp.eq.s32.totalorder %s25, 1
      %p197 = por %p195, %p196
      %p198 = scmp.ne.s32.totalorder %s187, %s188
      %p199 = scmp.eq.s32.totalorder %s25, 0
      %p200 = por %p198, %p199
      %p201 = scmp.ne.s32.totalorder %s187, %s188
      %p202 = scmp.eq.s32.totalorder %s26, 1
      %p203 = por %p201, %p202
      %p205 = scmp.ne.s32.totalorder %s188, %s204
      %p206 = scmp.eq.s32.totalorder %s26, 0
      %p207 = por %p205, %p206
      %s208 = ssub.s32 %s27, %s39
      %s209 = ssub.s32 %s28, %s35
      %s210 = sor.u32 %s208, %s209
      %p211 = scmp.eq.s32.totalorder %s210, 0
      %s213 = sadd.s32 %s212, 1
      %s214 = scalar_select %p211, %s212, %s213
      %p217 = pneg %p211
      %p218 = scmp.eq.s32.totalorder %s20, 1
      %p219 = por %p217, %p218
      %p220 = scmp.ne.s32.totalorder %s212, %s215
      %p221 = scmp.eq.s32.totalorder %s20, 0
      %p222 = por %p220, %p221
      %p223 = scmp.ne.s32.totalorder %s212, %s215
      %p224 = scmp.eq.s32.totalorder %s25, 1
      %p225 = por %p223, %p224
      %p226 = scmp.ne.s32.totalorder %s215, %s216
      %p227 = scmp.eq.s32.totalorder %s25, 0
      %p228 = por %p226, %p227
      %p229 = scmp.ne.s32.totalorder %s215, %s216
      %p230 = scmp.eq.s32.totalorder %s26, 1
      %p231 = por %p229, %p230
      %p233 = scmp.ne.s32.totalorder %s216, %s232
      %p234 = scmp.eq.s32.totalorder %s26, 0
      %p235 = por %p233, %p234
      %p236 = scmp.le.s32.totalorder 1, %s20
      %p237 = scmp.lt.s32.totalorder %s20, 3
      %p238 = pnand %p236, %p237
      %p239 = pneg %p238
      // Predicated region
      $region9: #{tpu_custom_call.1} parent=5 // pred_check
        _
      $region10: #{tpu_custom_call.1} parent=5 // pred_check_branch
        %241 = sbr.rel (%p238) target = $region12
      $region11: #{tpu_custom_call.1} parent=5 // pred_region
        %s242 = ssub.s32 %s20, 1
        // Predicated region
        $region13: #{tpu_custom_call.1} parent=11 // pred_check
          %p243 = pneg %p81
        $region14: #{tpu_custom_call.1} parent=11 // pred_check_branch
          %245 = sbr.rel (%p243) target = $region16
        $region15: #{tpu_custom_call.1} parent=11 // pred_region
          _
        $region16: #{tpu_custom_call.1} parent=11 // pred_fallthru
          _
        // Predicated region
        $region17: #{tpu_custom_call.1} parent=11 // pred_check
          %p246 = pneg %p102
        $region18: #{tpu_custom_call.1} parent=11 // pred_check_branch
          %248 = sbr.rel (%p246) target = $region20
        $region19: #{tpu_custom_call.1} parent=11 // pred_region
          _
        $region20: #{tpu_custom_call.1} parent=11 // pred_fallthru
          _
        // Predicated region
        $region21: #{tpu_custom_call.1} parent=11 // pred_check
          %p249 = pneg %p151
        $region22: #{tpu_custom_call.1} parent=11 // pred_check_branch
          %251 = sbr.rel (%p249) target = $region24
        $region23: #{tpu_custom_call.1} parent=11 // pred_region
          _
        $region24: #{tpu_custom_call.1} parent=11 // pred_fallthru
          _
        // Predicated region
        $region25: #{tpu_custom_call.1} parent=11 // pred_check
          %p252 = pneg %p172
        $region26: #{tpu_custom_call.1} parent=11 // pred_check_branch
          %254 = sbr.rel (%p252) target = $region28
        $region27: #{tpu_custom_call.1} parent=11 // pred_region
          _
        $region28: #{tpu_custom_call.1} parent=11 // pred_fallthru
          _
      $region12: #{tpu_custom_call.1} parent=5 // pred_fallthru
        _
      %p255 = scmp.lt.s32.totalorder %s20, 2
      // Predicated region
      $region29: #{tpu_custom_call.1} parent=5 // pred_check
        %p256 = pneg %p255
      $region30: #{tpu_custom_call.1} parent=5 // pred_check_branch
        %258 = sbr.rel (%p256) target = $region32
      $region31: #{tpu_custom_call.1} parent=5 // pred_region
        // Predicated region
        $region33: #{tpu_custom_call.1} parent=31 // pred_check
          %p259 = pneg %p54
        $region34: #{tpu_custom_call.1} parent=31 // pred_check_branch
          %261 = sbr.rel (%p259) target = $region36
        $region35: #{tpu_custom_call.1} parent=31 // pred_region
          %p262 = scmp.lt.s32.totalorder %s27, 1
          %s263 = scalar_select %p262, %s27, 1
          %p264 = scmp.lt.s32.totalorder %s28, 0
          %s265 = scalar_select %p264, %s28, 0
          %s266 = smul.addr %s263, 5
          %s267 = sadd.s32 %s265, %s266
          %s268 = smul.addr %s267, 4
          %s269 = scalar_lea.vmem %s0, %s268
        $region36: #{tpu_custom_call.1} parent=31 // pred_fallthru
          _
        // Predicated region
        $region37: #{tpu_custom_call.1} parent=31 // pred_check
          %p270 = pneg %p124
        $region38: #{tpu_custom_call.1} parent=31 // pred_check_branch
          %272 = sbr.rel (%p270) target = $region40
        $region39: #{tpu_custom_call.1} parent=31 // pred_region
          %p273 = scmp.lt.s32.totalorder %s27, 1
          %s274 = scalar_select %p273, %s27, 1
          %p275 = scmp.lt.s32.totalorder %s28, 0
          %s276 = scalar_select %p275, %s28, 0
          %s277 = sadd.s32 %s276, %s274
          %s278 = smul.addr %s277, 2
          %s279 = scalar_lea.vmem %s3, %s278
        $region40: #{tpu_custom_call.1} parent=31 // pred_fallthru
          _
      $region32: #{tpu_custom_call.1} parent=5 // pred_fallthru
        _
      %p280 = scmp.le.s32.totalorder 1, %s20
      %p281 = scmp.lt.s32.totalorder %s20, 3
      %p282 = pnand %p280, %p281
      %p283 = pneg %p282
      // Predicated region
      $region41: #{tpu_custom_call.1} parent=5 // pred_check
        _
      $region42: #{tpu_custom_call.1} parent=5 // pred_check_branch
        %285 = sbr.rel (%p282) target = $region44
      $region43: #{tpu_custom_call.1} parent=5 // pred_region
        %s286 = ssub.s32 %s20, 1
        %p287 = scmp.lt.s32.totalorder %s29, 1
        %s288 = scalar_select %p287, %s29, 1
        %p289 = scmp.lt.s32.totalorder %s30, 0
        %s290 = scalar_select %p289, %s30, 0
        %s291 = smul.addr %s288, 5
        %s292 = sadd.s32 %s290, %s291
        %s293 = smul.addr %s292, 4
        %s294 = scalar_lea.vmem %s0, %s293
        %p295 = pneg %p60
        %p296 = pneg %p57
        %p297 = pneg %p81
        %p298 = pneg %p78
        %p299 = pneg %p102
        %p300 = pneg %p99
        %p301 = scmp.lt.s32.totalorder %s29, 1
        %s302 = scalar_select %p301, %s29, 1
        %p303 = scmp.lt.s32.totalorder %s30, 0
        %s304 = scalar_select %p303, %s30, 0
        %s305 = sadd.s32 %s304, %s302
        %s306 = smul.addr %s305, 2
        %s307 = scalar_lea.vmem %s3, %s306
        %p308 = pneg %p130
        %p309 = pneg %p127
        %p310 = pneg %p151
        %p311 = pneg %p148
        %p312 = pneg %p172
        %p313 = pneg %p169
        %p314 = pneg %p200
        %p315 = pneg %p197
        %s316 = sand.u32 %s187, 1
        %s317 = scalar_lea.sflag [#allocation3], %s316
        %s318 = sand.u32 %s187, 1
        %s319 = smul.addr %s318, 64
        %s320 = scalar_lea.vmem [#allocation2], %s319
        %p321 = pneg %p228
        %p322 = pneg %p225
        %s323 = sand.u32 %s215, 1
        %s324 = scalar_lea.sflag [#allocation5], %s323
        %s325 = sand.u32 %s215, 1
        %s326 = smul.addr %s325, 32
        %s327 = scalar_lea.vmem [#allocation4], %s326
        %p328 = scmp.lt.s32.totalorder %s29, 1
        %s329 = scalar_select %p328, %s29, 1
        %p330 = scmp.lt.s32.totalorder %s30, 0
        %s331 = scalar_select %p330, %s30, 0
        %s332 = smul.addr %s329, 5
        %s333 = sadd.s32 %s331, %s332
        %s334 = smul.addr %s333, 4
        %s335 = scalar_lea.vmem %s0, %s334
        %p336 = scmp.lt.s32.totalorder %s29, 1
        %s337 = scalar_select %p336, %s29, 1
        %p338 = scmp.lt.s32.totalorder %s30, 0
        %s339 = scalar_select %p338, %s30, 0
        %s340 = sadd.s32 %s339, %s337
        %s341 = smul.addr %s340, 2
        %s342 = scalar_lea.vmem %s3, %s341
        %v344 = vld [vmem:[%s1] sm:$0xf]
        %v345 = vld [vmem:[%s1 + $0x4] sm:$0xf]
        %v346 = vld [vmem:[%s1 + $0x8] sm:$0xf]
        %v347 = vld [vmem:[%s1 + $0xc] sm:$0xf]
        %v348 = vld [vmem:[%s1 + $0x10] sm:$0xf]
        %v349 = vld [vmem:[%s1 + $0x14] sm:$0xf]
        %v350 = vld [vmem:[%s1 + $0x18] sm:$0xf]
        %v351 = vld [vmem:[%s1 + $0x1c] sm:$0xf]
        %v352 = vld [vmem:[%s335] sm:$0xf]
        %v353 = vld [vmem:[%s335 + $0x4] sm:$0xf]
        %v354 = vld [vmem:[%s335 + $0x8] sm:$0xf]
        %v355 = vld [vmem:[%s335 + $0xc] sm:$0xf]
        %v356 = vld [vmem:[%s335 + $0x10] sm:$0x3]
        %v357 = vld [vmem:[%s2] sm:$0xff]
        %v358 = vld [vmem:[%s2 + $0x8] sm:$0xff]
        %v359 = vld [vmem:[%s2 + $0x10] sm:$0xff]
        %v360 = vld [vmem:[%s2 + $0x18] sm:$0xff]
        %v361 = vld [vmem:[%s2 + $0x20] sm:$0xff]
        %v362 = vld [vmem:[%s2 + $0x28] sm:$0xff]
        %v363 = vld [vmem:[%s2 + $0x30] sm:$0xff]
        %v364 = vld [vmem:[%s2 + $0x38] sm:$0xff]
        %366 = vset.pattern.permute.xlu0 0
        %367 = vperm.xlu0 %366, %v357
        %v368 = vpop.permute.xlu0 %367
        %371 = vset.pattern.permute.xlu0 0
        %372 = vperm.xlu0 %371, %v358
        %v373 = vpop.permute.xlu0 %372
        %376 = vset.pattern.permute.xlu0 0
        %377 = vperm.xlu0 %376, %v359
        %v378 = vpop.permute.xlu0 %377
        %381 = vset.pattern.permute.xlu0 0
        %382 = vperm.xlu0 %381, %v360
        %v383 = vpop.permute.xlu0 %382
        %386 = vset.pattern.permute.xlu0 0
        %387 = vperm.xlu0 %386, %v361
        %v388 = vpop.permute.xlu0 %387
        %391 = vset.pattern.permute.xlu0 0
        %392 = vperm.xlu0 %391, %v362
        %v393 = vpop.permute.xlu0 %392
        %396 = vset.pattern.permute.xlu0 0
        %397 = vperm.xlu0 %396, %v363
        %v398 = vpop.permute.xlu0 %397
        %401 = vset.pattern.permute.xlu0 0
        %402 = vperm.xlu0 %401, %v364
        %v403 = vpop.permute.xlu0 %402
        %v413 = vunpack.c.l.b16 %v344
        %v414 = vunpack.c.l.b16 %v345
        %v415 = vunpack.c.l.b16 %v346
        %v416 = vunpack.c.l.b16 %v347
        %v417 = vunpack.c.l.b16 %v348
        %v418 = vunpack.c.l.b16 %v349
        %v419 = vunpack.c.l.b16 %v350
        %v420 = vunpack.c.l.b16 %v351
        %v421 = vpack.c.b16 %v414, %v413
        %v422 = vpack.c.b16 %v416, %v415
        %v423 = vpack.c.b16 %v418, %v417
        %v424 = vpack.c.b16 %v420, %v419
        %v430 = vunpack.c.l.b16 %v352
        %v431 = vunpack.c.l.b16 %v353
        %v432 = vunpack.c.l.b16 %v354
        %v433 = vunpack.c.l.b16 %v355
        %v434 = vunpack.c.l.b16 %v356
        %v435 = vpack.c.b16 %v431, %v430
        %v436 = vpack.c.b16 %v433, %v432
        %v437 = vpack.c.b16 %v434, %v434
        %vm440 = vcmask 293888
        %v442 = vsel %vm440, %v421, 0
        %v445 = vsel %vm440, %v422, 0
        %v448 = vsel %vm440, %v423, 0
        %v451 = vsel %vm440, %v424, 0
        %vm453 = vcmask 1041408
        %v455 = vsel %vm453, %v437, 0
        %457 = vmatprep.subr.bf16.mxu0 0
        %458 = vmatpush1.bf16.msra.mxu0 0
        %459 = vmatprep.subr.bf16.mxu0 0
        %460 = vmatpush1.bf16.msra.mxu0 0
        %461 = vmatprep.subr.bf16.mxu0 0
        %462 = vmatpush1.bf16.msra.mxu0 0
        %463 = vmatprep.subr.bf16.mxu0 0
        %464 = vmatpush1.bf16.msra.mxu0 0
        %465 = vmatprep.subr.bf16.mxu0 0
        %466 = vmatpush1.bf16.msra.mxu0 0
        %467 = vmatprep.subr.bf16.mxu0 0
        %468 = vmatpush1.bf16.msra.mxu0 %v455
        %469 = vmatprep.subr.bf16.mxu0 0
        %470 = vmatpush1.bf16.msra.mxu0 %v436
        %471 = vmatprep.subr.bf16.mxu0 0
        %472 = vmatpush1.bf16.msra.mxu0 %v435
        %473 = vmatprep.subr.bf16.mxu0 0
        %474 = vmatpush2.bf16.msra.mxu0 0
        %475 = vmatprep.subr.bf16.mxu0 0
        %476 = vmatpush2.bf16.msra.mxu0 0
        %477 = vmatprep.subr.bf16.mxu0 0
        %478 = vmatpush2.bf16.msra.mxu0 0
        %479 = vmatprep.subr.bf16.mxu0 0
        %480 = vmatpush2.bf16.msra.mxu0 0
        %481 = vmatprep.subr.bf16.mxu0 0
        %482 = vmatpush2.bf16.msra.mxu0 0
        %483 = vmatprep.subr.bf16.mxu0 0
        %484 = vmatpush2.bf16.msra.mxu0 0
        %485 = vmatprep.subr.bf16.mxu0 0
        %486 = vmatpush2.bf16.msra.mxu0 0
        %487 = vmatprep.subr.bf16.mxu0 0
        %488 = vmatpush2.bf16.msra.mxu0 0
        %489 = vmatprep.mubr.bf16.mxu0 0
        %490 = vmatmul.mubr.bf16.gmra.mxu0 %v442
        %v491 = vpop.f32.mrf.mxu0
        %v492 = vadd.f32 %v368, %v491
        %v493 = vpop.f32.mrf.mxu0
        %v494 = vpop.f32.mrf.mxu0
        %v495 = vadd.f32 %v373, %v494
        %v496 = vpop.f32.mrf.mxu0
        %497 = vmatprep.mubr.bf16.mxu0 0
        %498 = vmatmul.mubr.bf16.gmra.mxu0 %v445
        %v499 = vpop.f32.mrf.mxu0
        %v500 = vadd.f32 %v378, %v499
        %v501 = vpop.f32.mrf.mxu0
        %v502 = vpop.f32.mrf.mxu0
        %v503 = vadd.f32 %v383, %v502
        %v504 = vpop.f32.mrf.mxu0
        %505 = vmatprep.mubr.bf16.mxu0 0
        %506 = vmatmul.mubr.bf16.gmra.mxu0 %v448
        %v507 = vpop.f32.mrf.mxu0
        %v508 = vadd.f32 %v388, %v507
        %v509 = vpop.f32.mrf.mxu0
        %v510 = vpop.f32.mrf.mxu0
        %v511 = vadd.f32 %v393, %v510
        %v512 = vpop.f32.mrf.mxu0
        %513 = vmatprep.mubr.bf16.mxu0 0
        %514 = vmatmul.mubr.bf16.gmra.mxu0 %v451
        %v515 = vpop.f32.mrf.mxu0
        %v516 = vadd.f32 %v398, %v515
        %v517 = vpop.f32.mrf.mxu0
        %v518 = vpop.f32.mrf.mxu0
        %v519 = vadd.f32 %v403, %v518
        %v520 = vpop.f32.mrf.mxu0
        %521 = vdwg.mxu0
        %522 = vst [vmem:[%s320] sm:$0xff] %v492
        %523 = vst [vmem:[%s320 + $0x8] sm:$0xff] %v495
        %524 = vst [vmem:[%s320 + $0x10] sm:$0xff] %v500
        %525 = vst [vmem:[%s320 + $0x18] sm:$0xff] %v503
        %526 = vst [vmem:[%s320 + $0x20] sm:$0xff] %v508
        %527 = vst [vmem:[%s320 + $0x28] sm:$0xff] %v511
        %528 = vst [vmem:[%s320 + $0x30] sm:$0xff] %v516
        %529 = vst [vmem:[%s320 + $0x38] sm:$0xff] %v519
        %v530 = vld [vmem:[%s342] sm:$0x1]
        %v531 = vld [vmem:[%s342 + $0x1] sm:$0x1]
        %v532 = vlaneseq
        %v533 = vshrl.u32 %v532, 7
        %v534 = vadd.s32 %v533, 8
        %v535 = vadd.s32 %v533, 16
        %v536 = vadd.s32 %v533, 24
        %vm537 = vcmp.lt.s32.totalorder %v533, 16
        %vm538 = vcmp.lt.s32.totalorder %v534, 16
        %vm539 = vcmp.lt.s32.totalorder %v535, 16
        %vm540 = vcmp.lt.s32.totalorder %v536, 16
        %v541 = vsel %vm537, 1, 0
        %v542 = vsel %vm538, 1, 0
        %v543 = vsel %vm539, 1, 0
        %v544 = vsel %vm540, 1, 0
        %vm545 = vcmp.eq.s32.totalorder %v541, 1
        %vm546 = vcmp.eq.s32.totalorder %v542, 1
        %vm547 = vcmp.eq.s32.totalorder %v543, 1
        %vm548 = vcmp.eq.s32.totalorder %v544, 1
        %v549 = vlaneseq
        %v550 = vshrl.u32 %v549, 7
        %v551 = vsub.s32 0, %v550
        %v552 = vrot.slane %v530, %v551
        %v553 = vlaneseq
        %v554 = vshrl.u32 %v553, 7
        %v555 = vsub.s32 0, %v554
        %v556 = vrot.slane %v531, %v555
        %v557 = vsel %vm545, %v552, %v556
        %v558 = vsel %vm546, %v552, %v556
        %v559 = vsel %vm547, %v552, %v556
        %v560 = vsel %vm548, %v552, %v556
        %v561 = vld [vmem:[%s4] sm:$0xff]
        %v562 = vld [vmem:[%s4 + $0x8] sm:$0xff]
        %v563 = vld [vmem:[%s4 + $0x10] sm:$0xff]
        %v564 = vld [vmem:[%s4 + $0x18] sm:$0xff]
        %566 = vset.pattern.permute.xlu0 0
        %567 = vperm.xlu0 %566, %v561
        %v568 = vpop.permute.xlu0 %567
        %571 = vset.pattern.permute.xlu0 0
        %572 = vperm.xlu0 %571, %v562
        %v573 = vpop.permute.xlu0 %572
        %576 = vset.pattern.permute.xlu0 0
        %577 = vperm.xlu0 %576, %v563
        %v578 = vpop.permute.xlu0 %577
        %581 = vset.pattern.permute.xlu0 0
        %582 = vperm.xlu0 %581, %v564
        %v583 = vpop.permute.xlu0 %582
        %v585 = vmul.f32 %v557, %v568
        %v586 = vmul.f32 %v558, %v573
        %v587 = vmul.f32 %v559, %v578
        %v588 = vmul.f32 %v560, %v583
        %v589 = vld [vmem:[%s5] sm:$0xff]
        %v590 = vld [vmem:[%s5 + $0x8] sm:$0xff]
        %v591 = vld [vmem:[%s5 + $0x10] sm:$0xff]
        %v592 = vld [vmem:[%s5 + $0x18] sm:$0xff]
        %594 = vset.pattern.permute.xlu0 0
        %595 = vperm.xlu0 %594, %v589
        %v596 = vpop.permute.xlu0 %595
        %599 = vset.pattern.permute.xlu0 0
        %600 = vperm.xlu0 %599, %v590
        %v601 = vpop.permute.xlu0 %600
        %604 = vset.pattern.permute.xlu0 0
        %605 = vperm.xlu0 %604, %v591
        %v606 = vpop.permute.xlu0 %605
        %609 = vset.pattern.permute.xlu0 0
        %610 = vperm.xlu0 %609, %v592
        %v611 = vpop.permute.xlu0 %610
        %v613 = vadd.f32 %v585, %v596
        %v614 = vadd.f32 %v586, %v601
        %v615 = vadd.f32 %v587, %v606
        %v616 = vadd.f32 %v588, %v611
        %v617 = vand.u32 2147483647, %v613
        %vm618 = vcmp.le.f32.partialorder %v617, 0.7853982
        %vm619 = vcmp.lt.s32.totalorder %v613, 0
        %v620 = vand.u32 %v613, 2139095040
        %v621 = vshrl.u32 %v620, 23
        %v622 = vsub.s32 %v621, 127
        %v623 = vand.u32 2147483647, %v613
        %v624 = vand.u32 %v623, 8388607
        %v625 = vor.u32 %v624, 8388608
        %v626 = vsub.s32 0, %v625
        %v627 = vadd.s32 %v622, 1
        %vm628 = vcmp.gt.s32.totalorder %v627, 0
        %v629 = vsel %vm628, %v627, 0
        %v630 = vshrl.u32 %v629, 5
        %v631 = vand.u32 %v629, 31
        %v632 = vsub.s32 32, %v631
        %v633 = vshrl.u32 683565275, %v632
        %v634 = vshll.u32 683565275, %v631
        %v635 = vshrl.u32 2475754826, %v632
        %v636 = vor.u32 %v634, %v635
        %v637 = vshll.u32 2475754826, %v631
        %v638 = vshrl.u32 2131351028, %v632
        %v639 = vor.u32 %v637, %v638
        %v640 = vshll.u32 2131351028, %v631
        %v641 = vshrl.u32 2102212464, %v632
        %v642 = vor.u32 %v640, %v641
        %v643 = vshll.u32 2102212464, %v631
        %v644 = vshrl.u32 920167782, %v632
        %v645 = vor.u32 %v643, %v644
        %v646 = vshll.u32 920167782, %v631
        %v647 = vshrl.u32 1326507024, %v632
        %v648 = vor.u32 %v646, %v647
        %vm649 = vcmp.lt.s32.totalorder %v630, 1
        %vm650 = vcmp.lt.s32.totalorder %v630, 2
        %vm651 = vcmp.lt.s32.totalorder %v630, 3
        %vm652 = vcmp.lt.s32.totalorder %v630, 4
        %v653 = vsel %vm649, %v633, %v636
        %v654 = vsel %vm652, %v642, 2102212464
        %v655 = vsel %vm651, %v639, %v654
        %v656 = vsel %vm650, %v653, %v655
        %v657 = vsel %vm649, %v636, %v639
        %v658 = vsel %vm652, %v645, 920167782
        %v659 = vsel %vm651, %v642, %v658
        %v660 = vsel %vm650, %v657, %v659
        %v661 = vsel %vm649, %v639, %v642
        %v662 = vsel %vm652, %v648, 1326507024
        %v663 = vsel %vm651, %v645, %v662
        %v664 = vsel %vm650, %v661, %v663
        %v665 = vshll.u32 %v625, 8
        %v666 = vmul.u32.u64.compose %v665, %v664
        %v667 = vextract.low.u32 %v666
        %v668 = vextract.high.u32 %v666
        %v669 = vmul.u32.u64.compose %v665, %v660
        %v670 = vextract.low.u32 %v669
        %v671 = vextract.high.u32 %v669
        %v672 = vmul.u32 %v665, %v656
        %v673 = vadd.s32 %v668, %v670
        %vm674 = vc.u32 %v668, %v670
        %v675 = vadd.s32 %v671, 1
        %v676 = vsel %vm674, %v675, %v671
        %v677 = vadd.s32 %v672, %v676
        %v678 = vadd.s32 %v677, 536870912
        %v679 = vshrl.u32 %v678, 30
        %v680 = vshll.u32 %v679, 30
        %v681 = vsub.s32 %v677, %v680
        %vm682 = vcmp.lt.s32.totalorder %v681, 0
        %v683 = vsub.s32 0, %v681
        %v684 = vsel %vm682, %v683, %v681
        %v685 = vclz %v684
        %v686 = vsub.s32 %v685, 2
        %vm687 = vcmp.gt.s32.totalorder 0, %v686
        %v688 = vsel %vm687, 0, %v686
        %v689 = vsub.s32 32, %v688
        %v690 = vshll.u32 %v681, %v688
        %v691 = vshrl.u32 %v673, %v689
        %v692 = vor.u32 %v690, %v691
        %v693 = vsub.s32 4294967266, %v688
        %v694 = vadd.s32 %v693, 127
        %v695 = vshll.u32 %v694, 23
        %v696 = vor.u32 4788187, %v695
        %v697 = vand.u32 2147483647, %v696
        %v699 = vcvt.s32.f32 %v692
        %v700 = vmul.f32 %v699, %v697
        %v701 = vxor.u32 %v700, 2147483648
        %v702 = vsel %vm619, %v701, %v700
        %v703 = vsub.s32 4, %v679
        %v704 = vsel %vm619, %v703, %v679
        %v705 = vsel %vm618, %v613, %v702
        %v706 = vsel %vm618, 0, %v704
        %v707 = vcosq.f32.pop %v705
        %v708 = vsinq.f32.pop %v705
        %vm709 = vweird.f32 %v613
        %v710 = vadd.s32 %v706, 3
        %v711 = vand.u32 %v710, 3
        %vm712 = vcmp.lt.s32.totalorder %v711, 2
        %vm713 = vcmp.eq.s32.totalorder %v711, 0
        %v714 = vxor.u32 %v708, 2147483648
        %v715 = vsel %vm713, %v707, %v714
        %vm716 = vcmp.eq.s32.totalorder %v711, 2
        %v717 = vxor.u32 %v707, 2147483648
        %v718 = vsel %vm716, %v717, %v708
        %v719 = vsel %vm712, %v715, %v718
        %v720 = vsel %vm709, nan, %v719
        %v721 = vand.u32 2147483647, %v614
        %vm722 = vcmp.le.f32.partialorder %v721, 0.7853982
        %vm723 = vcmp.lt.s32.totalorder %v614, 0
        %v724 = vand.u32 %v614, 2139095040
        %v725 = vshrl.u32 %v724, 23
        %v726 = vsub.s32 %v725, 127
        %v727 = vand.u32 2147483647, %v614
        %v728 = vand.u32 %v727, 8388607
        %v729 = vor.u32 %v728, 8388608
        %v730 = vsub.s32 0, %v729
        %v731 = vadd.s32 %v726, 1
        %vm732 = vcmp.gt.s32.totalorder %v731, 0
        %v733 = vsel %vm732, %v731, 0
        %v734 = vshrl.u32 %v733, 5
        %v735 = vand.u32 %v733, 31
        %v736 = vsub.s32 32, %v735
        %v737 = vshrl.u32 683565275, %v736
        %v738 = vshll.u32 683565275, %v735
        %v739 = vshrl.u32 2475754826, %v736
        %v740 = vor.u32 %v738, %v739
        %v741 = vshll.u32 2475754826, %v735
        %v742 = vshrl.u32 2131351028, %v736
        %v743 = vor.u32 %v741, %v742
        %v744 = vshll.u32 2131351028, %v735
        %v745 = vshrl.u32 2102212464, %v736
        %v746 = vor.u32 %v744, %v745
        %v747 = vshll.u32 2102212464, %v735
        %v748 = vshrl.u32 920167782, %v736
        %v749 = vor.u32 %v747, %v748
        %v750 = vshll.u32 920167782, %v735
        %v751 = vshrl.u32 1326507024, %v736
        %v752 = vor.u32 %v750, %v751
        %vm753 = vcmp.lt.s32.totalorder %v734, 1
        %vm754 = vcmp.lt.s32.totalorder %v734, 2
        %vm755 = vcmp.lt.s32.totalorder %v734, 3
        %vm756 = vcmp.lt.s32.totalorder %v734, 4
        %v757 = vsel %vm753, %v737, %v740
        %v758 = vsel %vm756, %v746, 2102212464
        %v759 = vsel %vm755, %v743, %v758
        %v760 = vsel %vm754, %v757, %v759
        %v761 = vsel %vm753, %v740, %v743
        %v762 = vsel %vm756, %v749, 920167782
        %v763 = vsel %vm755, %v746, %v762
        %v764 = vsel %vm754, %v761, %v763
        %v765 = vsel %vm753, %v743, %v746
        %v766 = vsel %vm756, %v752, 1326507024
        %v767 = vsel %vm755, %v749, %v766
        %v768 = vsel %vm754, %v765, %v767
        %v769 = vshll.u32 %v729, 8
        %v770 = vmul.u32.u64.compose %v769, %v768
        %v771 = vextract.low.u32 %v770
        %v772 = vextract.high.u32 %v770
        %v773 = vmul.u32.u64.compose %v769, %v764
        %v774 = vextract.low.u32 %v773
        %v775 = vextract.high.u32 %v773
        %v776 = vmul.u32 %v769, %v760
        %v777 = vadd.s32 %v772, %v774
        %vm778 = vc.u32 %v772, %v774
        %v779 = vadd.s32 %v775, 1
        %v780 = vsel %vm778, %v779, %v775
        %v781 = vadd.s32 %v776, %v780
        %v782 = vadd.s32 %v781, 536870912
        %v783 = vshrl.u32 %v782, 30
        %v784 = vshll.u32 %v783, 30
        %v785 = vsub.s32 %v781, %v784
        %vm786 = vcmp.lt.s32.totalorder %v785, 0
        %v787 = vsub.s32 0, %v785
        %v788 = vsel %vm786, %v787, %v785
        %v789 = vclz %v788
        %v790 = vsub.s32 %v789, 2
        %vm791 = vcmp.gt.s32.totalorder 0, %v790
        %v792 = vsel %vm791, 0, %v790
        %v793 = vsub.s32 32, %v792
        %v794 = vshll.u32 %v785, %v792
        %v795 = vshrl.u32 %v777, %v793
        %v796 = vor.u32 %v794, %v795
        %v797 = vsub.s32 4294967266, %v792
        %v798 = vadd.s32 %v797, 127
        %v799 = vshll.u32 %v798, 23
        %v800 = vor.u32 4788187, %v799
        %v801 = vand.u32 2147483647, %v800
        %v803 = vcvt.s32.f32 %v796
        %v804 = vmul.f32 %v803, %v801
        %v805 = vxor.u32 %v804, 2147483648
        %v806 = vsel %vm723, %v805, %v804
        %v807 = vsub.s32 4, %v783
        %v808 = vsel %vm723, %v807, %v783
        %v809 = vsel %vm722, %v614, %v806
        %v810 = vsel %vm722, 0, %v808
        %v811 = vcosq.f32.pop %v809
        %v812 = vsinq.f32.pop %v809
        %vm813 = vweird.f32 %v614
        %v814 = vadd.s32 %v810, 3
        %v815 = vand.u32 %v814, 3
        %vm816 = vcmp.lt.s32.totalorder %v815, 2
        %vm817 = vcmp.eq.s32.totalorder %v815, 0
        %v818 = vxor.u32 %v812, 2147483648
        %v819 = vsel %vm817, %v811, %v818
        %vm820 = vcmp.eq.s32.totalorder %v815, 2
        %v821 = vxor.u32 %v811, 2147483648
        %v822 = vsel %vm820, %v821, %v812
        %v823 = vsel %vm816, %v819, %v822
        %v824 = vsel %vm813, nan, %v823
        %v825 = vand.u32 2147483647, %v615
        %vm826 = vcmp.le.f32.partialorder %v825, 0.7853982
        %vm827 = vcmp.lt.s32.totalorder %v615, 0
        %v828 = vand.u32 %v615, 2139095040
        %v829 = vshrl.u32 %v828, 23
        %v830 = vsub.s32 %v829, 127
        %v831 = vand.u32 2147483647, %v615
        %v832 = vand.u32 %v831, 8388607
        %v833 = vor.u32 %v832, 8388608
        %v834 = vsub.s32 0, %v833
        %v835 = vadd.s32 %v830, 1
        %vm836 = vcmp.gt.s32.totalorder %v835, 0
        %v837 = vsel %vm836, %v835, 0
        %v838 = vshrl.u32 %v837, 5
        %v839 = vand.u32 %v837, 31
        %v840 = vsub.s32 32, %v839
        %v841 = vshrl.u32 683565275, %v840
        %v842 = vshll.u32 683565275, %v839
        %v843 = vshrl.u32 2475754826, %v840
        %v844 = vor.u32 %v842, %v843
        %v845 = vshll.u32 2475754826, %v839
        %v846 = vshrl.u32 2131351028, %v840
        %v847 = vor.u32 %v845, %v846
        %v848 = vshll.u32 2131351028, %v839
        %v849 = vshrl.u32 2102212464, %v840
        %v850 = vor.u32 %v848, %v849
        %v851 = vshll.u32 2102212464, %v839
        %v852 = vshrl.u32 920167782, %v840
        %v853 = vor.u32 %v851, %v852
        %v854 = vshll.u32 920167782, %v839
        %v855 = vshrl.u32 1326507024, %v840
        %v856 = vor.u32 %v854, %v855
        %vm857 = vcmp.lt.s32.totalorder %v838, 1
        %vm858 = vcmp.lt.s32.totalorder %v838, 2
        %vm859 = vcmp.lt.s32.totalorder %v838, 3
        %vm860 = vcmp.lt.s32.totalorder %v838, 4
        %v861 = vsel %vm857, %v841, %v844
        %v862 = vsel %vm860, %v850, 2102212464
        %v863 = vsel %vm859, %v847, %v862
        %v864 = vsel %vm858, %v861, %v863
        %v865 = vsel %vm857, %v844, %v847
        %v866 = vsel %vm860, %v853, 920167782
        %v867 = vsel %vm859, %v850, %v866
        %v868 = vsel %vm858, %v865, %v867
        %v869 = vsel %vm857, %v847, %v850
        %v870 = vsel %vm860, %v856, 1326507024
        %v871 = vsel %vm859, %v853, %v870
        %v872 = vsel %vm858, %v869, %v871
        %v873 = vshll.u32 %v833, 8
        %v874 = vmul.u32.u64.compose %v873, %v872
        %v875 = vextract.low.u32 %v874
        %v876 = vextract.high.u32 %v874
        %v877 = vmul.u32.u64.compose %v873, %v868
        %v878 = vextract.low.u32 %v877
        %v879 = vextract.high.u32 %v877
        %v880 = vmul.u32 %v873, %v864
        %v881 = vadd.s32 %v876, %v878
        %vm882 = vc.u32 %v876, %v878
        %v883 = vadd.s32 %v879, 1
        %v884 = vsel %vm882, %v883, %v879
        %v885 = vadd.s32 %v880, %v884
        %v886 = vadd.s32 %v885, 536870912
        %v887 = vshrl.u32 %v886, 30
        %v888 = vshll.u32 %v887, 30
        %v889 = vsub.s32 %v885, %v888
        %vm890 = vcmp.lt.s32.totalorder %v889, 0
        %v891 = vsub.s32 0, %v889
        %v892 = vsel %vm890, %v891, %v889
        %v893 = vclz %v892
        %v894 = vsub.s32 %v893, 2
        %vm895 = vcmp.gt.s32.totalorder 0, %v894
        %v896 = vsel %vm895, 0, %v894
        %v897 = vsub.s32 32, %v896
        %v898 = vshll.u32 %v889, %v896
        %v899 = vshrl.u32 %v881, %v897
        %v900 = vor.u32 %v898, %v899
        %v901 = vsub.s32 4294967266, %v896
        %v902 = vadd.s32 %v901, 127
        %v903 = vshll.u32 %v902, 23
        %v904 = vor.u32 4788187, %v903
        %v905 = vand.u32 2147483647, %v904
        %v907 = vcvt.s32.f32 %v900
        %v908 = vmul.f32 %v907, %v905
        %v909 = vxor.u32 %v908, 2147483648
        %v910 = vsel %vm827, %v909, %v908
        %v911 = vsub.s32 4, %v887
        %v912 = vsel %vm827, %v911, %v887
        %v913 = vsel %vm826, %v615, %v910
        %v914 = vsel %vm826, 0, %v912
        %v915 = vcosq.f32.pop %v913
        %v916 = vsinq.f32.pop %v913
        %vm917 = vweird.f32 %v615
        %v918 = vadd.s32 %v914, 3
        %v919 = vand.u32 %v918, 3
        %vm920 = vcmp.lt.s32.totalorder %v919, 2
        %vm921 = vcmp.eq.s32.totalorder %v919, 0
        %v922 = vxor.u32 %v916, 2147483648
        %v923 = vsel %vm921, %v915, %v922
        %vm924 = vcmp.eq.s32.totalorder %v919, 2
        %v925 = vxor.u32 %v915, 2147483648
        %v926 = vsel %vm924, %v925, %v916
        %v927 = vsel %vm920, %v923, %v926
        %v928 = vsel %vm917, nan, %v927
        %v929 = vand.u32 2147483647, %v616
        %vm930 = vcmp.le.f32.partialorder %v929, 0.7853982
        %vm931 = vcmp.lt.s32.totalorder %v616, 0
        %v932 = vand.u32 %v616, 2139095040
        %v933 = vshrl.u32 %v932, 23
        %v934 = vsub.s32 %v933, 127
        %v935 = vand.u32 2147483647, %v616
        %v936 = vand.u32 %v935, 8388607
        %v937 = vor.u32 %v936, 8388608
        %v938 = vsub.s32 0, %v937
        %v939 = vadd.s32 %v934, 1
        %vm940 = vcmp.gt.s32.totalorder %v939, 0
        %v941 = vsel %vm940, %v939, 0
        %v942 = vshrl.u32 %v941, 5
        %v943 = vand.u32 %v941, 31
        %v944 = vsub.s32 32, %v943
        %v945 = vshrl.u32 683565275, %v944
        %v946 = vshll.u32 683565275, %v943
        %v947 = vshrl.u32 2475754826, %v944
        %v948 = vor.u32 %v946, %v947
        %v949 = vshll.u32 2475754826, %v943
        %v950 = vshrl.u32 2131351028, %v944
        %v951 = vor.u32 %v949, %v950
        %v952 = vshll.u32 2131351028, %v943
        %v953 = vshrl.u32 2102212464, %v944
        %v954 = vor.u32 %v952, %v953
        %v955 = vshll.u32 2102212464, %v943
        %v956 = vshrl.u32 920167782, %v944
        %v957 = vor.u32 %v955, %v956
        %v958 = vshll.u32 920167782, %v943
        %v959 = vshrl.u32 1326507024, %v944
        %v960 = vor.u32 %v958, %v959
        %vm961 = vcmp.lt.s32.totalorder %v942, 1
        %vm962 = vcmp.lt.s32.totalorder %v942, 2
        %vm963 = vcmp.lt.s32.totalorder %v942, 3
        %vm964 = vcmp.lt.s32.totalorder %v942, 4
        %v965 = vsel %vm961, %v945, %v948
        %v966 = vsel %vm964, %v954, 2102212464
        %v967 = vsel %vm963, %v951, %v966
        %v968 = vsel %vm962, %v965, %v967
        %v969 = vsel %vm961, %v948, %v951
        %v970 = vsel %vm964, %v957, 920167782
        %v971 = vsel %vm963, %v954, %v970
        %v972 = vsel %vm962, %v969, %v971
        %v973 = vsel %vm961, %v951, %v954
        %v974 = vsel %vm964, %v960, 1326507024
        %v975 = vsel %vm963, %v957, %v974
        %v976 = vsel %vm962, %v973, %v975
        %v977 = vshll.u32 %v937, 8
        %v978 = vmul.u32.u64.compose %v977, %v976
        %v979 = vextract.low.u32 %v978
        %v980 = vextract.high.u32 %v978
        %v981 = vmul.u32.u64.compose %v977, %v972
        %v982 = vextract.low.u32 %v981
        %v983 = vextract.high.u32 %v981
        %v984 = vmul.u32 %v977, %v968
        %v985 = vadd.s32 %v980, %v982
        %vm986 = vc.u32 %v980, %v982
        %v987 = vadd.s32 %v983, 1
        %v988 = vsel %vm986, %v987, %v983
        %v989 = vadd.s32 %v984, %v988
        %v990 = vadd.s32 %v989, 536870912
        %v991 = vshrl.u32 %v990, 30
        %v992 = vshll.u32 %v991, 30
        %v993 = vsub.s32 %v989, %v992
        %vm994 = vcmp.lt.s32.totalorder %v993, 0
        %v995 = vsub.s32 0, %v993
        %v996 = vsel %vm994, %v995, %v993
        %v997 = vclz %v996
        %v998 = vsub.s32 %v997, 2
        %vm999 = vcmp.gt.s32.totalorder 0, %v998
        %v1000 = vsel %vm999, 0, %v998
        %v1001 = vsub.s32 32, %v1000
        %v1002 = vshll.u32 %v993, %v1000
        %v1003 = vshrl.u32 %v985, %v1001
        %v1004 = vor.u32 %v1002, %v1003
        %v1005 = vsub.s32 4294967266, %v1000
        %v1006 = vadd.s32 %v1005, 127
        %v1007 = vshll.u32 %v1006, 23
        %v1008 = vor.u32 4788187, %v1007
        %v1009 = vand.u32 2147483647, %v1008
        %v1011 = vcvt.s32.f32 %v1004
        %v1012 = vmul.f32 %v1011, %v1009
        %v1013 = vxor.u32 %v1012, 2147483648
        %v1014 = vsel %vm931, %v1013, %v1012
        %v1015 = vsub.s32 4, %v991
        %v1016 = vsel %vm931, %v1015, %v991
        %v1017 = vsel %vm930, %v616, %v1014
        %v1018 = vsel %vm930, 0, %v1016
        %v1019 = vcosq.f32.pop %v1017
        %v1020 = vsinq.f32.pop %v1017
        %vm1021 = vweird.f32 %v616
        %v1022 = vadd.s32 %v1018, 3
        %v1023 = vand.u32 %v1022, 3
        %vm1024 = vcmp.lt.s32.totalorder %v1023, 2
        %vm1025 = vcmp.eq.s32.totalorder %v1023, 0
        %v1026 = vxor.u32 %v1020, 2147483648
        %v1027 = vsel %vm1025, %v1019, %v1026
        %vm1028 = vcmp.eq.s32.totalorder %v1023, 2
        %v1029 = vxor.u32 %v1019, 2147483648
        %v1030 = vsel %vm1028, %v1029, %v1020
        %v1031 = vsel %vm1024, %v1027, %v1030
        %v1032 = vsel %vm1021, nan, %v1031
        %1033 = vst [vmem:[%s327] sm:$0xff] %v720
        %1034 = vst [vmem:[%s327 + $0x8] sm:$0xff] %v824
        %1035 = vst [vmem:[%s327 + $0x10] sm:$0xff] %v928
        %1036 = vst [vmem:[%s327 + $0x18] sm:$0xff] %v1032
        %s1037 = sand.u32 %s187, 1
        %s1038 = scalar_lea.sflag [#allocation3], %s1037
        %s1039 = sand.u32 %s187, 1
        %s1040 = smul.addr %s1039, 64
        %s1041 = scalar_lea.vmem [#allocation2], %s1040
        %s1042 = sand.u32 %s215, 1
        %s1043 = scalar_lea.sflag [#allocation5], %s1042
        %s1044 = sand.u32 %s215, 1
        %s1045 = smul.addr %s1044, 32
        %s1046 = scalar_lea.vmem [#allocation4], %s1045
        // Predicated region
        $region45: #{tpu_custom_call.1} parent=43 // pred_check
          %p1047 = pneg %p197
        $region46: #{tpu_custom_call.1} parent=43 // pred_check_branch
          %1049 = sbr.rel (%p1047) target = $region48
        $region47: #{tpu_custom_call.1} parent=43 // pred_region
          %s1051 = ssub.s32 1024, 1024
          %1052 = vsyncadd %s1038, %s1051
          %s1053 = smul.addr %s29, 8
          %s1054 = sadd.s32 %s30, %s1053
          %s1055 = smul.addr %s1054, 128
          %s1056 = scalar_lea.hbm %s6, %s1055
          %s1057 = sshll.u32 %s1041, 4
          %s1058 = int_to_ptr.vmem [resolvable:$true] %s1057
          %1063 = dma.vmem_to_hbm [thread:$0]  %s1058, 1024, %s1056, %s1038, 128, 128, 8
        $region48: #{tpu_custom_call.1} parent=43 // pred_fallthru
          _
        // Predicated region
        $region49: #{tpu_custom_call.1} parent=43 // pred_check
          %p1064 = pneg %p225
        $region50: #{tpu_custom_call.1} parent=43 // pred_check_branch
          %1066 = sbr.rel (%p1064) target = $region52
        $region51: #{tpu_custom_call.1} parent=43 // pred_region
          %s1068 = ssub.s32 512, 512
          %1069 = vsyncadd %s1043, %s1068
          %s1070 = smul.addr %s29, 4
          %s1071 = sadd.s32 %s30, %s1070
          %s1072 = smul.addr %s1071, 128
          %s1073 = scalar_lea.hbm %s7, %s1072
          %s1074 = sshll.u32 %s1046, 4
          %s1075 = int_to_ptr.vmem [resolvable:$true] %s1074
          %1080 = dma.vmem_to_hbm [thread:$0]  %s1075, 512, %s1073, %s1043, 128, 128, 8
        $region52: #{tpu_custom_call.1} parent=43 // pred_fallthru
          _
      $region44: #{tpu_custom_call.1} parent=5 // pred_fallthru
        _
      %p1081 = scmp.le.s32.totalorder 2, %s20
      // Predicated region
      $region53: #{tpu_custom_call.1} parent=5 // pred_check
        %p1082 = pneg %p1081
      $region54: #{tpu_custom_call.1} parent=5 // pred_check_branch
        %1084 = sbr.rel (%p1082) target = $region56
      $region55: #{tpu_custom_call.1} parent=5 // pred_region
        %s1085 = ssub.s32 %s20, 2
        // Predicated region
        $region57: #{tpu_custom_call.1} parent=55 // pred_check
          %p1086 = pneg %p203
        $region58: #{tpu_custom_call.1} parent=55 // pred_check_branch
          %1088 = sbr.rel (%p1086) target = $region60
        $region59: #{tpu_custom_call.1} parent=55 // pred_region
          %s1089 = sand.u32 %s188, 1
          %s1090 = scalar_lea.sflag [#allocation3], %s1089
          %s1091 = sand.u32 %s188, 1
          %s1092 = smul.addr %s1091, 64
          %s1093 = scalar_lea.vmem [#allocation2], %s1092
          %1094 = dma.done %s1090, 1024
        $region60: #{tpu_custom_call.1} parent=55 // pred_fallthru
          _
        // Predicated region
        $region61: #{tpu_custom_call.1} parent=55 // pred_check
          %p1095 = pneg %p231
        $region62: #{tpu_custom_call.1} parent=55 // pred_check_branch
          %1097 = sbr.rel (%p1095) target = $region64
        $region63: #{tpu_custom_call.1} parent=55 // pred_region
          %s1098 = sand.u32 %s216, 1
          %s1099 = scalar_lea.sflag [#allocation5], %s1098
          %s1100 = sand.u32 %s216, 1
          %s1101 = smul.addr %s1100, 32
          %s1102 = scalar_lea.vmem [#allocation4], %s1101
          %1103 = dma.done %s1099, 512
        $region64: #{tpu_custom_call.1} parent=55 // pred_fallthru
          _
      $region56: #{tpu_custom_call.1} parent=5 // pred_fallthru
        _
    $region6: #{tpu_custom_call.1} parent=1 // loop_footer
      %s24 = sadd.s32 1, %s20
    $region7: #{tpu_custom_call.1} parent=1 // loop_footer_branch
      %19 = sbr.rel target = $region3
    $region8: #{tpu_custom_call.1} parent=1 // loop_exit
      _
    %1104 = vsyncpa [#allocation3], 1
    %s1105 = scalar_lea.sflag [#allocation3], 1
    %1106 = vsyncpa %s1105, 1
    %1107 = vsyncpa [#allocation5], 1
    %s1108 = scalar_lea.sflag [#allocation5], 1
    %1109 = vsyncpa %s1108, 1

</llo_original>
